<compile_context>
chip_gen: v5e
topology: v5e:2x2
jax: 0.10.0
libtpu: 0.0.40
codegen_flags: <defaults>
</compile_context>

<pallas_src>
import functools

import jax
import jax.numpy as jnp
from jax.experimental import pallas as pl
from jax.experimental.pallas import tpu as pltpu


def _round_up(n, m):
    return ((n + m - 1) // m) * m


# --------------------------------------------------------------------------------------
# One-time parameter packing (pad + pre-transpose + pre-standardize).
# --------------------------------------------------------------------------------------
def pack_mlp_params(params, *, weight_standardization=False):
    """Pack torch-style params [(W(out,in), b(out)), ...] for the fused kernel.

    Returns (packed_list, meta) where packed_list = [wt0, b0, wt1, b1, ...] with
      wt_l : (in_pad, out_pad)  zero-padded, pre-transposed, pre-standardized weight
      b_l  : (1, out_pad)       zero-padded bias
    and meta = dict with true dims.  Call once (or under jit as a cached step) —
    NOT per forward call.
    """
    n_layers = len(params)
    packed, dims = [], []
    for li, (w, b) in enumerate(params):
        o, i = w.shape
        hidden = (li < n_layers - 1) and n_layers > 1
        if weight_standardization and hidden:
            # Exact torch custom `Linear.forward` semantics: mean over in-features,
            # unbiased std (n-1), +1e-5, divide.  Done once here, in f32, then cast
            # back to the param dtype.
            assert i > 1, "weight standardization with in_features == 1 -> NaN (torch.std)"
            wf = w.astype(jnp.float32)
            mean = jnp.mean(wf, axis=1, keepdims=True)
            wc = wf - mean
            std = jnp.sqrt(jnp.sum(wc * wc, axis=1, keepdims=True) / (i - 1)) + 1e-5
            w = (wc / std).astype(w.dtype)
        op, ip = _round_up(o, 128), _round_up(i, 128)
        # Pre-transpose to (in, out): kernel matmul is h[M,K] @ wt[K,N] (no in-kernel
        # transpose).  Zero padding keeps padded activation columns exactly 0.
        wt = jnp.zeros((ip, op), w.dtype).at[:i, :o].set(w.T)
        bp = jnp.zeros((1, op), b.dtype).at[0, :o].set(b)
        packed += [wt, bp]
        dims.append((i, o, ip, op))
    meta = {"dims": tuple(dims), "n_layers": n_layers}
    return packed, meta


# --------------------------------------------------------------------------------------
# Kernel
# --------------------------------------------------------------------------------------
def _mlp_kernel(*refs, relu_flags):
    """refs = (x, wt0, b0, wt1, b1, ..., out).  Weights are pre-transposed (K, N)."""
    x_ref, o_ref = refs[0], refs[-1]
    h = x_ref[...]                                             # (tm, in_pad)

    for li, relu in enumerate(relu_flags):
        wt = refs[1 + 2 * li][...]                             # (in_pad, out_pad)
        b = refs[2 + 2 * li][...].astype(jnp.float32)          # (1, out_pad)
        # Feed the MXU in the weight dtype (bf16 if params are bf16), accumulate f32.
        h = jnp.dot(h.astype(wt.dtype), wt, preferred_element_type=jnp.float32) + b
        if relu:
            h = jnp.maximum(h, 0.0)                            # f32 elementwise (v5e-safe)

    o_ref[...] = h.astype(o_ref.dtype)


# --------------------------------------------------------------------------------------
# Forward on pre-packed params (the hot path)
# --------------------------------------------------------------------------------------
def mlp_forward_packed(x, packed, meta):
    n_layers = meta["n_layers"]
    if n_layers == 0:
        return x  # torch.nn.Identity

    dims = meta["dims"]
    B, in_dim = x.shape
    assert in_dim == dims[0][0], "input dim mismatch with packed params"
    out_dim = dims[-1][1]
    in_pad0 = dims[0][2]
    out_pad_last = dims[-1][3]
    dtype = x.dtype

    # Batch tiling: 256-multiple tiles feed the v6e/v7x 256x256 MXU; small batches use
    # a single 8-aligned tile.
    tm = 256 if B >= 256 else _round_up(B, 8)
    B_pad = _round_up(B, tm)
    grid = (B_pad // tm,)

    # Zero-pad activations once per call (cheap: activations only).
    xp = jnp.zeros((B_pad, in_pad0), dtype).at[:B, :in_dim].set(x)

    # BlockSpecs: activation tiles indexed by the batch-grid position; weights/biases
    # use a constant index_map -> DMA'd once, VMEM-resident for all batch tiles.
    in_specs = [pl.BlockSpec((tm, in_pad0), lambda i: (i, 0))]
    for wt, bp in zip(packed[0::2], packed[1::2]):
        in_specs.append(pl.BlockSpec(wt.shape, lambda i: (0, 0)))
        in_specs.append(pl.BlockSpec(bp.shape, lambda i: (0, 0)))
    out_spec = pl.BlockSpec((tm, out_pad_last), lambda i: (i, 0))

    relu_flags = tuple((li < n_layers - 1) and n_layers > 1 for li in range(n_layers))
    kernel = functools.partial(_mlp_kernel, relu_flags=relu_flags)

    # Cost estimate + VMEM budget from the actual residency footprint.
    flops = 2 * B_pad * sum(ip * op for (_, _, ip, op) in dims)
    weight_bytes = sum(int(a.size) * a.dtype.itemsize for a in packed)
    act_bytes = (xp.size * xp.dtype.itemsize
                 + B_pad * out_pad_last * jnp.dtype(dtype).itemsize)
    cost = pl.CostEstimate(flops=flops, transcendentals=0,
                           bytes_accessed=weight_bytes + act_bytes)
    max_feat = max(max(ip, op) for (_, _, ip, op) in dims)
    resident = (weight_bytes                       # resident weights/biases
                + 2 * tm * (in_pad0 + out_pad_last) * jnp.dtype(dtype).itemsize  # 2x buffered tiles
                + 2 * tm * max_feat * 4)           # f32 intermediates headroom
    vmem_limit = int(min(max(2 * resident + (4 << 20), 24 << 20), 48 << 20))

    out = pl.pallas_call(
        kernel,
        out_shape=jax.ShapeDtypeStruct((B_pad, out_pad_last), dtype),
        grid=grid,
        in_specs=in_specs,
        out_specs=out_spec,
        compiler_params=pltpu.CompilerParams(
            dimension_semantics=("parallel",),     # batch tiles are independent (v7x megacore)
            vmem_limit_bytes=vmem_limit,
        ),
        cost_estimate=cost,
    )(xp, *packed)
    return out[:B, :out_dim]


def mlp_forward(x, params, *, weight_standardization=False):
    """Convenience wrapper: pack (should be cached by the caller) + fused forward."""
    if len(params) == 0:
        return x
    packed, meta = pack_mlp_params(params, weight_standardization=weight_standardization)
    return mlp_forward_packed(x, packed, meta)


# --------------------------------------------------------------------------------------
# Init + pure-JAX reference (for the sanity check)
# --------------------------------------------------------------------------------------
def init_mlp_params(key, input_dim, output_dim, hidden_dim, num_layers):
    """nn.Linear-style init: U(-1/sqrt(fan_in), 1/sqrt(fan_in))."""
    params = []
    if num_layers == 0:
        return params
    if num_layers == 1:
        dims = [(input_dim, output_dim)]
    else:
        dims = [(input_dim, hidden_dim)]
        dims += [(hidden_dim, hidden_dim)] * (num_layers - 2)
        dims += [(hidden_dim, output_dim)]
    for (fan_in, fan_out) in dims:
        key, kw, kb = jax.random.split(key, 3)
        bound = 1.0 / (fan_in ** 0.5)
        w = jax.random.uniform(kw, (fan_out, fan_in), jnp.float32, -bound, bound)
        b = jax.random.uniform(kb, (fan_out,), jnp.float32, -bound, bound)
        params.append((w, b))
    return params


def _reference_forward(x, params, *, weight_standardization=False):
    n_layers = len(params)
    if n_layers == 0:
        return x
    h = x
    for li, (w, b) in enumerate(params):
        last = li == n_layers - 1
        ww = w
        if weight_standardization and not last and n_layers > 1:
            mean = jnp.mean(ww, axis=1, keepdims=True)
            wc = ww - mean
            std = jnp.sqrt(jnp.sum(wc * wc, axis=1, keepdims=True) / (ww.shape[1] - 1)) + 1e-5
            ww = wc / std
        h = h @ ww.T + b
        if not last and n_layers > 1:
            h = jnp.maximum(h, 0.0)
    return h


if __name__ == "__main__":
    key = jax.random.PRNGKey(0)
    kx, kp = jax.random.split(key)

    batch, input_dim, hidden_dim, output_dim, num_layers = 2, 16, 32, 8, 3
    weight_standardization = True

    x = jax.random.normal(kx, (batch, input_dim), jnp.float32)
    params = init_mlp_params(kp, input_dim, output_dim, hidden_dim, num_layers)

    # Pack once (weight standardization + padding + transpose hoisted out of the hot path).
    packed, meta = pack_mlp_params(params, weight_standardization=weight_standardization)

    out = jax.block_until_ready(mlp_forward_packed(x, packed, meta))
    ref = _reference_forward(x, params, weight_standardization=weight_standardization)
    assert out.shape == (batch, output_dim)
    assert jnp.allclose(out, ref, atol=1e-4, rtol=1e-4), "mismatch vs reference (deep MLP)"

    # num_layers == 1 path (plain nn.Linear: no WS, no ReLU even if flag is set).
    params1 = init_mlp_params(kp, input_dim, output_dim, hidden_dim, 1)
    out1 = jax.block_until_ready(
        mlp_forward(x, params1, weight_standardization=True))
    ref1 = _reference_forward(x, params1, weight_standardization=True)
    assert out1.shape == (batch, output_dim)
    assert jnp.allclose(out1, ref1, atol=1e-4, rtol=1e-4), "mismatch vs reference (1 layer)"

    # num_layers == 0 path (Identity).
    out0 = jax.block_until_ready(mlp_forward(x, [], weight_standardization=True))
    assert jnp.array_equal(out0, x)

    print("KERNEL_OK")
</pallas_src>

<mosaic_0001>
module attributes {stable_mosaic.version = 11 : i64} {
  func.func @_mlp_kernel(%arg0: i32, %arg1: memref<8x128xf32, #tpu.memory_space<vmem>>, %arg2: memref<128x128xf32, #tpu.memory_space<vmem>>, %arg3: memref<1x128xf32, #tpu.memory_space<vmem>>, %arg4: memref<128x128xf32, #tpu.memory_space<vmem>>, %arg5: memref<1x128xf32, #tpu.memory_space<vmem>>, %arg6: memref<128x128xf32, #tpu.memory_space<vmem>>, %arg7: memref<1x128xf32, #tpu.memory_space<vmem>>, %arg8: memref<8x128xf32, #tpu.memory_space<vmem>>) attributes {dimension_semantics = [#tpu.dimension_semantics<parallel>], iteration_bounds = array<i64: 1>, scalar_prefetch = 0 : i64, scratch_operands = 0 : i64, tpu.core_type = #tpu.core_type<tc>, window_params = [{transform_indices = @transform_0, window_bounds = array<i64: 8, 128>}, {pipeline_mode = #tpu.pipeline_mode<synchronous>, transform_indices = @transform_1, window_bounds = array<i64: 128, 128>}, {pipeline_mode = #tpu.pipeline_mode<synchronous>, transform_indices = @transform_2, window_bounds = array<i64: 1, 128>}, {pipeline_mode = #tpu.pipeline_mode<synchronous>, transform_indices = @transform_3, window_bounds = array<i64: 128, 128>}, {pipeline_mode = #tpu.pipeline_mode<synchronous>, transform_indices = @transform_4, window_bounds = array<i64: 1, 128>}, {pipeline_mode = #tpu.pipeline_mode<synchronous>, transform_indices = @transform_5, window_bounds = array<i64: 128, 128>}, {pipeline_mode = #tpu.pipeline_mode<synchronous>, transform_indices = @transform_6, window_bounds = array<i64: 1, 128>}, {transform_indices = @transform_7, window_bounds = array<i64: 8, 128>}]} {
    %c0 = arith.constant 0 : index
    %c0_0 = arith.constant 0 : index
    %0 = vector.load %arg1[%c0, %c0_0] : memref<8x128xf32, #tpu.memory_space<vmem>>, vector<8x128xf32>
    %c0_1 = arith.constant 0 : index
    %c0_2 = arith.constant 0 : index
    %1 = vector.load %arg2[%c0_1, %c0_2] : memref<128x128xf32, #tpu.memory_space<vmem>>, vector<128x128xf32>
    %c0_3 = arith.constant 0 : index
    %c0_4 = arith.constant 0 : index
    %2 = vector.load %arg3[%c0_3, %c0_4] : memref<1x128xf32, #tpu.memory_space<vmem>>, vector<1x128xf32>
    %cst = arith.constant dense<0.000000e+00> : vector<8x128xf32>
    %3 = tpu.matmul %0, %1, %cst {dimension_numbers = #tpu.dot_dimension_numbers<[1], [0], [0], [1], [0, 0, 1, 1], [], []>} : vector<8x128xf32>, vector<128x128xf32>, vector<8x128xf32> -> vector<8x128xf32>
    %4 = vector.broadcast %2 : vector<1x128xf32> to vector<8x128xf32>
    %5 = arith.addf %3, %4 : vector<8x128xf32>
    %cst_5 = arith.constant 0.000000e+00 : f32
    %6 = vector.broadcast %cst_5 : f32 to vector<8x128xf32>
    %7 = arith.maximumf %5, %6 : vector<8x128xf32>
    %c0_6 = arith.constant 0 : index
    %c0_7 = arith.constant 0 : index
    %8 = vector.load %arg4[%c0_6, %c0_7] : memref<128x128xf32, #tpu.memory_space<vmem>>, vector<128x128xf32>
    %c0_8 = arith.constant 0 : index
    %c0_9 = arith.constant 0 : index
    %9 = vector.load %arg5[%c0_8, %c0_9] : memref<1x128xf32, #tpu.memory_space<vmem>>, vector<1x128xf32>
    %cst_10 = arith.constant dense<0.000000e+00> : vector<8x128xf32>
    %10 = tpu.matmul %7, %8, %cst_10 {dimension_numbers = #tpu.dot_dimension_numbers<[1], [0], [0], [1], [0, 0, 1, 1], [], []>} : vector<8x128xf32>, vector<128x128xf32>, vector<8x128xf32> -> vector<8x128xf32>
    %11 = vector.broadcast %9 : vector<1x128xf32> to vector<8x128xf32>
    %12 = arith.addf %10, %11 : vector<8x128xf32>
    %cst_11 = arith.constant 0.000000e+00 : f32
    %13 = vector.broadcast %cst_11 : f32 to vector<8x128xf32>
    %14 = arith.maximumf %12, %13 : vector<8x128xf32>
    %c0_12 = arith.constant 0 : index
    %c0_13 = arith.constant 0 : index
    %15 = vector.load %arg6[%c0_12, %c0_13] : memref<128x128xf32, #tpu.memory_space<vmem>>, vector<128x128xf32>
    %c0_14 = arith.constant 0 : index
    %c0_15 = arith.constant 0 : index
    %16 = vector.load %arg7[%c0_14, %c0_15] : memref<1x128xf32, #tpu.memory_space<vmem>>, vector<1x128xf32>
    %cst_16 = arith.constant dense<0.000000e+00> : vector<8x128xf32>
    %17 = tpu.matmul %14, %15, %cst_16 {dimension_numbers = #tpu.dot_dimension_numbers<[1], [0], [0], [1], [0, 0, 1, 1], [], []>} : vector<8x128xf32>, vector<128x128xf32>, vector<8x128xf32> -> vector<8x128xf32>
    %18 = vector.broadcast %16 : vector<1x128xf32> to vector<8x128xf32>
    %19 = arith.addf %17, %18 : vector<8x128xf32>
    %c0_17 = arith.constant 0 : index
    %c0_18 = arith.constant 0 : index
    %20 = vector.load %arg8[%c0_17, %c0_18] : memref<8x128xf32, #tpu.memory_space<vmem>>, vector<8x128xf32>
    tpu.vector_store %arg8[%c0_17, %c0_18], %19 {strides = array<i32>} : memref<8x128xf32, #tpu.memory_space<vmem>>, vector<8x128xf32>,
    return
  }
  func.func @transform_0(%arg0: i32) -> (i32, i32) {
    %c0_i32 = arith.constant 0 : i32
    %c0_i32_0 = arith.constant 0 : i32
    return %arg0, %c0_i32 : i32, i32
  }
  func.func @transform_1(%arg0: i32) -> (i32, i32) {
    %c0_i32 = arith.constant 0 : i32
    %c0_i32_0 = arith.constant 0 : i32
    %c0_i32_1 = arith.constant 0 : i32
    return %c0_i32, %c0_i32_0 : i32, i32
  }
  func.func @transform_2(%arg0: i32) -> (i32, i32) {
    %c0_i32 = arith.constant 0 : i32
    %c0_i32_0 = arith.constant 0 : i32
    %c0_i32_1 = arith.constant 0 : i32
    return %c0_i32, %c0_i32_0 : i32, i32
  }
  func.func @transform_3(%arg0: i32) -> (i32, i32) {
    %c0_i32 = arith.constant 0 : i32
    %c0_i32_0 = arith.constant 0 : i32
    %c0_i32_1 = arith.constant 0 : i32
    return %c0_i32, %c0_i32_0 : i32, i32
  }
  func.func @transform_4(%arg0: i32) -> (i32, i32) {
    %c0_i32 = arith.constant 0 : i32
    %c0_i32_0 = arith.constant 0 : i32
    %c0_i32_1 = arith.constant 0 : i32
    return %c0_i32, %c0_i32_0 : i32, i32
  }
  func.func @transform_5(%arg0: i32) -> (i32, i32) {
    %c0_i32 = arith.constant 0 : i32
    %c0_i32_0 = arith.constant 0 : i32
    %c0_i32_1 = arith.constant 0 : i32
    return %c0_i32, %c0_i32_0 : i32, i32
  }
  func.func @transform_6(%arg0: i32) -> (i32, i32) {
    %c0_i32 = arith.constant 0 : i32
    %c0_i32_0 = arith.constant 0 : i32
    %c0_i32_1 = arith.constant 0 : i32
    return %c0_i32, %c0_i32_0 : i32, i32
  }
  func.func @transform_7(%arg0: i32) -> (i32, i32) {
    %c0_i32 = arith.constant 0 : i32
    %c0_i32_0 = arith.constant 0 : i32
    return %arg0, %c0_i32 : i32, i32
  }
}

</mosaic_0001>

<llo_original>
// kernel: tpu_custom_call.1
$region0: #{tpu_custom_call.1}
  #allocation0 [shape = 'u32[]', space=smem, size = 0x4, offset = 0x4, fixed_abs, tag = 'smem constant byte address 0x4 - core index']
  #allocation1 [shape = 'u32[72,128]{1,0:T(1,128)}', space=vmem, size = 0x9000, scoped, tag = 'internal scratch']
  %s0 = inlined_call_operand.hbm [shape: f32[8,128], index: 0, kind: input, shape index: {}]
  %s1 = inlined_call_operand.hbm [shape: f32[128,128], index: 1, kind: input, shape index: {}]
  %s2 = inlined_call_operand.vmem [shape: f32[1,128], index: 2, kind: input, shape index: {}]
  %s3 = inlined_call_operand.hbm [shape: f32[128,128], index: 3, kind: input, shape index: {}]
  %s4 = inlined_call_operand.vmem [shape: f32[1,128], index: 4, kind: input, shape index: {}]
  %s5 = inlined_call_operand.hbm [shape: f32[128,128], index: 5, kind: input, shape index: {}]
  %s6 = inlined_call_operand.vmem [shape: f32[1,128], index: 6, kind: input, shape index: {}]
  %s7 = inlined_call_operand.hbm [shape: f32[8,128], index: 7, kind: output, shape index: {}]
  %s8 = sld [smem:[#allocation0]]
  $region54: #{tpu_custom_call.1} parent=0
    _
  %s10 = ssub.s32 1, %s8
  %s11 = scalar_select 0, %s10, %s8
  $region1: #{tpu_custom_call.1} parent=0
    #allocation2 [shape = 'u8[4096]{0}', space=vmem, size = 0x1000, scoped, tag = 'input window, operand 0, single buffered']
    #allocation3 [shape = 's32[1]{0}', space=sflag, size = 0x4, scoped, tag = 'scoped memory for tpu_custom_call.1']
    #allocation4 [shape = 's32[1]{0}', space=sflag, size = 0x4, scoped, tag = 'scoped memory for tpu_custom_call.1']
    #allocation5 [shape = 'u8[65536]{0}', space=vmem, size = 0x10000, scoped, tag = 'input window, operand 1, single buffered']
    #allocation6 [shape = 's32[1]{0}', space=sflag, size = 0x4, scoped, tag = 'scoped memory for tpu_custom_call.1']
    #allocation7 [shape = 'u8[65536]{0}', space=vmem, size = 0x10000, scoped, tag = 'input window, operand 3, single buffered']
    #allocation8 [shape = 'u8[65536]{0}', space=vmem, size = 0x10000, scoped, tag = 'input window, operand 5, single buffered']
    #allocation9 [shape = 's32[1]{0}', space=sflag, size = 0x4, scoped, tag = 'scoped memory for tpu_custom_call.1']
    #allocation10 [shape = 'u8[4096]{0}', space=vmem, size = 0x1000, scoped, tag = 'output window, operand 0, single buffered']
    %12 = vsyncpa [#allocation3], 0
    %13 = vsyncpa [#allocation6], 0
    %14 = vsyncpa [#allocation9], 0
    %15 = vsyncpa [#allocation4], 0
    // Predicated region
    $region2: #{tpu_custom_call.1} parent=1 // pred_check
      _
    $region3: #{tpu_custom_call.1} parent=1 // pred_check_branch
      %17 = sbr.rel (0) target = $region5
    $region4: #{tpu_custom_call.1} parent=1 // pred_region
      %19 = vsyncadd [#allocation3], 0
      %s21 = sshll.u32 %s0, 4
      %s22 = int_to_ptr.hbm [resolvable:$true] %s21
      %s23 = sshll.u32 [#allocation2], 4
      %s24 = int_to_ptr.vmem [resolvable:$true] %s23
      %26 = dma.hbm_to_vmem [thread:$0]  %s22, 128, %s24, [#allocation3]
    $region5: #{tpu_custom_call.1} parent=1 // pred_fallthru
      _
    // Predicated region
    $region6: #{tpu_custom_call.1} parent=1 // pred_check
      _
    $region7: #{tpu_custom_call.1} parent=1 // pred_check_branch
      %28 = sbr.rel (0) target = $region9
    $region8: #{tpu_custom_call.1} parent=1 // pred_region
      %30 = vsyncadd [#allocation6], 0
      %s31 = sshll.u32 %s1, 4
      %s32 = int_to_ptr.hbm [resolvable:$true] %s31
      %s33 = sshll.u32 [#allocation5], 4
      %s34 = int_to_ptr.vmem [resolvable:$true] %s33
      %39 = dma.hbm_to_vmem [thread:$0]  %s32, 2048, %s34, [#allocation6], 128, 128, 8
    $region9: #{tpu_custom_call.1} parent=1 // pred_fallthru
      _
    // Predicated region
    $region10: #{tpu_custom_call.1} parent=1 // pred_check
      _
    $region11: #{tpu_custom_call.1} parent=1 // pred_check_branch
      %41 = sbr.rel (0) target = $region13
    $region12: #{tpu_custom_call.1} parent=1 // pred_region
      _
    $region13: #{tpu_custom_call.1} parent=1 // pred_fallthru
      _
    // Predicated region
    $region14: #{tpu_custom_call.1} parent=1 // pred_check
      _
    $region15: #{tpu_custom_call.1} parent=1 // pred_check_branch
      %43 = sbr.rel (0) target = $region17
    $region16: #{tpu_custom_call.1} parent=1 // pred_region
      %45 = vsyncadd [#allocation6], 0
      %s46 = sshll.u32 %s3, 4
      %s47 = int_to_ptr.hbm [resolvable:$true] %s46
      %s48 = sshll.u32 [#allocation7], 4
      %s49 = int_to_ptr.vmem [resolvable:$true] %s48
      %54 = dma.hbm_to_vmem [thread:$0]  %s47, 2048, %s49, [#allocation6], 128, 128, 8
    $region17: #{tpu_custom_call.1} parent=1 // pred_fallthru
      _
    // Predicated region
    $region18: #{tpu_custom_call.1} parent=1 // pred_check
      _
    $region19: #{tpu_custom_call.1} parent=1 // pred_check_branch
      %56 = sbr.rel (0) target = $region21
    $region20: #{tpu_custom_call.1} parent=1 // pred_region
      _
    $region21: #{tpu_custom_call.1} parent=1 // pred_fallthru
      _
    // Predicated region
    $region22: #{tpu_custom_call.1} parent=1 // pred_check
      _
    $region23: #{tpu_custom_call.1} parent=1 // pred_check_branch
      %58 = sbr.rel (0) target = $region25
    $region24: #{tpu_custom_call.1} parent=1 // pred_region
      %60 = vsyncadd [#allocation9], 0
      %s61 = sshll.u32 %s5, 4
      %s62 = int_to_ptr.hbm [resolvable:$true] %s61
      %s63 = sshll.u32 [#allocation8], 4
      %s64 = int_to_ptr.vmem [resolvable:$true] %s63
      %69 = dma.hbm_to_vmem [thread:$0]  %s62, 2048, %s64, [#allocation9], 128, 128, 8
    $region25: #{tpu_custom_call.1} parent=1 // pred_fallthru
      _
    // Predicated region
    $region26: #{tpu_custom_call.1} parent=1 // pred_check
      _
    $region27: #{tpu_custom_call.1} parent=1 // pred_check_branch
      %71 = sbr.rel (0) target = $region29
    $region28: #{tpu_custom_call.1} parent=1 // pred_region
      _
    $region29: #{tpu_custom_call.1} parent=1 // pred_fallthru
      _
    // Predicated region
    $region30: #{tpu_custom_call.1} parent=1 // pred_check
      _
    $region31: #{tpu_custom_call.1} parent=1 // pred_check_branch
      %73 = sbr.rel (0) target = $region33
    $region32: #{tpu_custom_call.1} parent=1 // pred_region
      %75 = dma.done [#allocation3], 128
    $region33: #{tpu_custom_call.1} parent=1 // pred_fallthru
      _
    // Predicated region
    $region34: #{tpu_custom_call.1} parent=1 // pred_check
      _
    $region35: #{tpu_custom_call.1} parent=1 // pred_check_branch
      %77 = sbr.rel (0) target = $region37
    $region36: #{tpu_custom_call.1} parent=1 // pred_region
      %79 = dma.done [#allocation6], 2048
    $region37: #{tpu_custom_call.1} parent=1 // pred_fallthru
      _
    // Predicated region
    $region38: #{tpu_custom_call.1} parent=1 // pred_check
      _
    $region39: #{tpu_custom_call.1} parent=1 // pred_check_branch
      %81 = sbr.rel (0) target = $region41
    $region40: #{tpu_custom_call.1} parent=1 // pred_region
      %83 = dma.done [#allocation6], 2048
    $region41: #{tpu_custom_call.1} parent=1 // pred_fallthru
      _
    // Predicated region
    $region42: #{tpu_custom_call.1} parent=1 // pred_check
      _
    $region43: #{tpu_custom_call.1} parent=1 // pred_check_branch
      %85 = sbr.rel (0) target = $region45
    $region44: #{tpu_custom_call.1} parent=1 // pred_region
      %87 = dma.done [#allocation9], 2048
    $region45: #{tpu_custom_call.1} parent=1 // pred_fallthru
      _
    %v88 = vld [vmem:[#allocation2] sm:$0xff]
    %v89 = vld [vmem:[#allocation5] sm:$0xff]
    %v90 = vld [vmem:[#allocation5 + $0x8] sm:$0xff]
    %v91 = vld [vmem:[#allocation5 + $0x10] sm:$0xff]
    %v92 = vld [vmem:[#allocation5 + $0x18] sm:$0xff]
    %v93 = vld [vmem:[#allocation5 + $0x20] sm:$0xff]
    %v94 = vld [vmem:[#allocation5 + $0x28] sm:$0xff]
    %v95 = vld [vmem:[#allocation5 + $0x30] sm:$0xff]
    %v96 = vld [vmem:[#allocation5 + $0x38] sm:$0xff]
    %v97 = vld [vmem:[#allocation5 + $0x40] sm:$0xff]
    %v98 = vld [vmem:[#allocation5 + $0x48] sm:$0xff]
    %v99 = vld [vmem:[#allocation5 + $0x50] sm:$0xff]
    %v100 = vld [vmem:[#allocation5 + $0x58] sm:$0xff]
    %v101 = vld [vmem:[#allocation5 + $0x60] sm:$0xff]
    %v102 = vld [vmem:[#allocation5 + $0x68] sm:$0xff]
    %v103 = vld [vmem:[#allocation5 + $0x70] sm:$0xff]
    %v104 = vld [vmem:[#allocation5 + $0x78] sm:$0xff]
    %v105 = vld [vmem:[%s2] sm:$0x1]
    %v107 = vperm.slane %v105, 0
    %109 = vmatpush.msra.mxu0 %v104
    %110 = vmatpush.msra.mxu0 %v103
    %111 = vmatpush.msra.mxu0 %v102
    %112 = vmatpush.msra.mxu0 %v101
    %113 = vmatpush.msra.mxu0 %v100
    %114 = vmatpush.msra.mxu0 %v99
    %115 = vmatpush.msra.mxu0 %v98
    %116 = vmatpush.msra.mxu0 %v97
    %117 = vmatpush.msra.mxu0 %v96
    %118 = vmatpush.msra.mxu0 %v95
    %119 = vmatpush.msra.mxu0 %v94
    %120 = vmatpush.msra.mxu0 %v93
    %121 = vmatpush.msra.mxu0 %v92
    %122 = vmatpush.msra.mxu0 %v91
    %123 = vmatpush.msra.mxu0 %v90
    %124 = vmatpush.msra.mxu0 %v89
    %125 = vmatmul.f32.gmra.mxu0 %v88
    %v126 = vpop.f32.mrf.mxu0
    %v127 = vadd.f32 %v107, %v126
    %128 = vdwg.mxu0
    %v129 = vmax.f32 %v127, 0.0
    %v130 = vld [vmem:[#allocation7] sm:$0xff]
    %v131 = vld [vmem:[#allocation7 + $0x8] sm:$0xff]
    %v132 = vld [vmem:[#allocation7 + $0x10] sm:$0xff]
    %v133 = vld [vmem:[#allocation7 + $0x18] sm:$0xff]
    %v134 = vld [vmem:[#allocation7 + $0x20] sm:$0xff]
    %v135 = vld [vmem:[#allocation7 + $0x28] sm:$0xff]
    %v136 = vld [vmem:[#allocation7 + $0x30] sm:$0xff]
    %v137 = vld [vmem:[#allocation7 + $0x38] sm:$0xff]
    %v138 = vld [vmem:[#allocation7 + $0x40] sm:$0xff]
    %v139 = vld [vmem:[#allocation7 + $0x48] sm:$0xff]
    %v140 = vld [vmem:[#allocation7 + $0x50] sm:$0xff]
    %v141 = vld [vmem:[#allocation7 + $0x58] sm:$0xff]
    %v142 = vld [vmem:[#allocation7 + $0x60] sm:$0xff]
    %v143 = vld [vmem:[#allocation7 + $0x68] sm:$0xff]
    %v144 = vld [vmem:[#allocation7 + $0x70] sm:$0xff]
    %v145 = vld [vmem:[#allocation7 + $0x78] sm:$0xff]
    %v146 = vld [vmem:[%s4] sm:$0x1]
    %v148 = vperm.slane %v146, 0
    %150 = vmatpush.msra.mxu0 %v145
    %151 = vmatpush.msra.mxu0 %v144
    %152 = vmatpush.msra.mxu0 %v143
    %153 = vmatpush.msra.mxu0 %v142
    %154 = vmatpush.msra.mxu0 %v141
    %155 = vmatpush.msra.mxu0 %v140
    %156 = vmatpush.msra.mxu0 %v139
    %157 = vmatpush.msra.mxu0 %v138
    %158 = vmatpush.msra.mxu0 %v137
    %159 = vmatpush.msra.mxu0 %v136
    %160 = vmatpush.msra.mxu0 %v135
    %161 = vmatpush.msra.mxu0 %v134
    %162 = vmatpush.msra.mxu0 %v133
    %163 = vmatpush.msra.mxu0 %v132
    %164 = vmatpush.msra.mxu0 %v131
    %165 = vmatpush.msra.mxu0 %v130
    %166 = vmatmul.f32.gmra.mxu0 %v129
    %v167 = vpop.f32.mrf.mxu0
    %v168 = vadd.f32 %v148, %v167
    %169 = vdwg.mxu0
    %v170 = vmax.f32 %v168, 0.0
    %v171 = vld [vmem:[#allocation8] sm:$0xff]
    %v172 = vld [vmem:[#allocation8 + $0x8] sm:$0xff]
    %v173 = vld [vmem:[#allocation8 + $0x10] sm:$0xff]
    %v174 = vld [vmem:[#allocation8 + $0x18] sm:$0xff]
    %v175 = vld [vmem:[#allocation8 + $0x20] sm:$0xff]
    %v176 = vld [vmem:[#allocation8 + $0x28] sm:$0xff]
    %v177 = vld [vmem:[#allocation8 + $0x30] sm:$0xff]
    %v178 = vld [vmem:[#allocation8 + $0x38] sm:$0xff]
    %v179 = vld [vmem:[#allocation8 + $0x40] sm:$0xff]
    %v180 = vld [vmem:[#allocation8 + $0x48] sm:$0xff]
    %v181 = vld [vmem:[#allocation8 + $0x50] sm:$0xff]
    %v182 = vld [vmem:[#allocation8 + $0x58] sm:$0xff]
    %v183 = vld [vmem:[#allocation8 + $0x60] sm:$0xff]
    %v184 = vld [vmem:[#allocation8 + $0x68] sm:$0xff]
    %v185 = vld [vmem:[#allocation8 + $0x70] sm:$0xff]
    %v186 = vld [vmem:[#allocation8 + $0x78] sm:$0xff]
    %v187 = vld [vmem:[%s6] sm:$0x1]
    %v189 = vperm.slane %v187, 0
    %191 = vmatpush.msra.mxu0 %v186
    %192 = vmatpush.msra.mxu0 %v185
    %193 = vmatpush.msra.mxu0 %v184
    %194 = vmatpush.msra.mxu0 %v183
    %195 = vmatpush.msra.mxu0 %v182
    %196 = vmatpush.msra.mxu0 %v181
    %197 = vmatpush.msra.mxu0 %v180
    %198 = vmatpush.msra.mxu0 %v179
    %199 = vmatpush.msra.mxu0 %v178
    %200 = vmatpush.msra.mxu0 %v177
    %201 = vmatpush.msra.mxu0 %v176
    %202 = vmatpush.msra.mxu0 %v175
    %203 = vmatpush.msra.mxu0 %v174
    %204 = vmatpush.msra.mxu0 %v173
    %205 = vmatpush.msra.mxu0 %v172
    %206 = vmatpush.msra.mxu0 %v171
    %207 = vmatmul.f32.gmra.mxu0 %v170
    %v208 = vpop.f32.mrf.mxu0
    %v209 = vadd.f32 %v189, %v208
    %210 = vdwg.mxu0
    %211 = vst [vmem:[#allocation10] sm:$0xff] %v209
    // Predicated region
    $region46: #{tpu_custom_call.1} parent=1 // pred_check
      _
    $region47: #{tpu_custom_call.1} parent=1 // pred_check_branch
      %213 = sbr.rel (0) target = $region49
    $region48: #{tpu_custom_call.1} parent=1 // pred_region
      %215 = vsyncadd [#allocation4], 0
      %s217 = sshll.u32 [#allocation10], 4
      %s218 = int_to_ptr.vmem [resolvable:$true] %s217
      %s219 = sshll.u32 %s7, 4
      %s220 = int_to_ptr.hbm [resolvable:$true] %s219
      %222 = dma.vmem_to_hbm [thread:$0]  %s218, 128, %s220, [#allocation4]
    $region49: #{tpu_custom_call.1} parent=1 // pred_fallthru
      _
    // Predicated region
    $region50: #{tpu_custom_call.1} parent=1 // pred_check
      _
    $region51: #{tpu_custom_call.1} parent=1 // pred_check_branch
      %224 = sbr.rel (0) target = $region53
    $region52: #{tpu_custom_call.1} parent=1 // pred_region
      %226 = dma.done [#allocation4], 128
    $region53: #{tpu_custom_call.1} parent=1 // pred_fallthru
      _
    %227 = vsyncpa [#allocation3], 1
    %228 = vsyncpa [#allocation6], 1
    %229 = vsyncpa [#allocation9], 1
    %230 = vsyncpa [#allocation4], 1

</llo_original>
